<compile_context>
chip_gen: v6e
topology: v6e:2x2x1
jax: 0.10.0
libtpu: 0.0.40
codegen_flags: <defaults>
</compile_context>

<pallas_src>
import functools

import jax
import jax.numpy as jnp
from jax.experimental import pallas as pl
from jax.experimental.pallas import tpu as pltpu


# ----------------------------------------------------------------------------
# Kernel A: branches (folded BN) + ReLU -> sum_u tile + pooled-sum accumulator
# ----------------------------------------------------------------------------
def _nsaf_branch_kernel(x1_ref, x2_ref, wa_ref, wb_ref, bc_ref,
                        su_ref, pool_ref, *, cout_p, hw_valid, thw, inv_hw):
    j = pl.program_id(1)

    @pl.when(j == 0)
    def _():
        pool_ref[...] = jnp.zeros_like(pool_ref)

    # Three 1x1 convs (branches stacked row-wise), f32 accumulation.
    # Split-K dots (input1 part + input2 part) keep the concat virtual; this
    # is fine while the kernel is HBM-bandwidth bound.
    y = (jnp.dot(wa_ref[...], x1_ref[...], preferred_element_type=jnp.float32)
         + jnp.dot(wb_ref[...], x2_ref[...], preferred_element_type=jnp.float32)
         + bc_ref[...])                                     # (3*Cout_p, tHW)
    y = jnp.maximum(y, 0.0)

    # a1 == a2 == a3 downstream, so only sum_u is needed.
    sum_u = y[0:cout_p] + y[cout_p:2 * cout_p] + y[2 * cout_p:3 * cout_p]
    su_ref[...] = sum_u.astype(su_ref.dtype)

    # Masked pooled-sum accumulation (exclude zero-padded spatial lanes).
    col = jax.lax.broadcasted_iota(jnp.int32, sum_u.shape, 1)
    valid = hw_valid - j * thw
    masked = jnp.where(col < valid, sum_u, 0.0)
    pool_ref[...] += jnp.sum(masked, axis=1, keepdims=True)

    @pl.when(j == pl.num_programs(1) - 1)
    def _():
        pool_ref[...] *= inv_hw


# ----------------------------------------------------------------------------
# Kernel B: selective-kernel MLP + collapsed softmax + per-channel rescale
# ----------------------------------------------------------------------------
def _nsaf_rescale_kernel(su_ref, pool_ref, a1t_ref, b1_ref, a2_ref, b2_ref,
                         o_ref):
    # The attention vector is recomputed per spatial tile: it is O(Cout*middle)
    # work, negligible next to reading/writing a (Cout_p, tHW) tile.
    s = pool_ref[...]                                                 # (Cp, 1)
    z = jnp.sum(a1t_ref[...] * s, axis=0, keepdims=True) + b1_ref[...]  # (1, mid)
    z = jnp.maximum(z, 0.0)
    a = jnp.sum(a2_ref[...] * z, axis=1, keepdims=True) + b2_ref[...]   # (Cp, 1)
    # softmax over cat([a, a, a]) along channels == exp(a-m) / (3*sum(exp(a-m)))
    # (padded rows carry bias -1e30 -> exp == 0, excluded from the denominator)
    m = jnp.max(a, axis=0, keepdims=True)
    e = jnp.exp(a - m)
    attn = e / (3.0 * jnp.sum(e, axis=0, keepdims=True))              # (Cp, 1)
    o_ref[...] = (su_ref[...].astype(jnp.float32) * attn).astype(o_ref.dtype)


# ----------------------------------------------------------------------------
# Wrapper: layout prep + BN folding + two pallas_calls
# ----------------------------------------------------------------------------
def nsaf_forward(params, input1, input2, *, compute_dtype=jnp.bfloat16,
                 block_lanes=512, out_dtype=None):
    """input1: (N, C1, H, W), input2: (N, C2, H2, W2) (NCHW, like PyTorch)."""
    N, C1, H, W = input1.shape
    if input2.shape[2:] != (H, W):
        # matches F.interpolate(mode='bilinear', align_corners=False)
        input2 = jax.image.resize(
            input2, (input2.shape[0], input2.shape[1], H, W), method="bilinear")
    C2 = input2.shape[1]
    HW = H * W
    out_dtype = input1.dtype if out_dtype is None else out_dtype

    cout = params["w1"].shape[0]
    middle = params["a1_w"].shape[0]
    cout_p = ((cout + 7) // 8) * 8           # sublane-aligned branch blocks
    eps = 1e-5

    # Spatial tile: multiple of 128, capped by block_lanes.
    hw128 = ((HW + 127) // 128) * 128
    thw = min(((block_lanes + 127) // 128) * 128, hw128)
    num_t = -(-HW // thw)
    hw_pad = num_t * thw

    # --- fold BatchNorm (eval-mode running stats) into the bias-free convs ---
    def fold(w, bn):
        gamma, beta, mean, var = bn
        scale = gamma / jnp.sqrt(var + eps)
        return scale[:, None] * w, beta - mean * scale

    def pad_rows(x, rows, fill=0.0):
        if x.shape[0] == rows:
            return x
        pad = jnp.full((rows - x.shape[0],) + x.shape[1:], fill, x.dtype)
        return jnp.concatenate([x, pad], axis=0)

    w_parts, b_parts = [], []
    for wk, bk in (("w1", "bn1"), ("w2", "bn2"), ("w3", "bn3")):
        we, be = fold(params[wk], params[bk])
        w_parts.append(pad_rows(we, cout_p))
        b_parts.append(pad_rows(be[:, None], cout_p))
    w_stack = jnp.concatenate(w_parts, axis=0)                # (3*Cout_p, Cin)
    b_stack = jnp.concatenate(b_parts, axis=0).astype(jnp.float32)
    wa = w_stack[:, :C1].astype(compute_dtype)                # input1 part
    wb = w_stack[:, C1:].astype(compute_dtype)                # input2 part

    a1t = pad_rows(params["a1_w"].T, cout_p).astype(jnp.float32)         # (Cp, mid)
    b1v = params["a1_b"][None, :].astype(jnp.float32)                    # (1, mid)
    a2w = pad_rows(params["a2_w"], cout_p).astype(jnp.float32)           # (Cp, mid)
    b2v = pad_rows(params["a2_b"][:, None].astype(jnp.float32),
                   cout_p, fill=-1e30)                                   # (Cp, 1)

    # Lane-dense activations (N, C, HW), zero-padded to a 128-lane multiple.
    x1f = input1.reshape(N, C1, HW)
    x2f = input2.reshape(N, C2, HW)
    if hw_pad != HW:
        x1f = jnp.pad(x1f, ((0, 0), (0, 0), (0, hw_pad - HW)))
        x2f = jnp.pad(x2f, ((0, 0), (0, 0), (0, hw_pad - HW)))
    x1f = x1f.astype(compute_dtype)
    x2f = x2f.astype(compute_dtype)

    inter_dtype = compute_dtype
    in_b = jnp.dtype(compute_dtype).itemsize
    inter_b = jnp.dtype(inter_dtype).itemsize
    out_b = jnp.dtype(out_dtype).itemsize

    # vmem limits from the actual double-buffered footprint (+50% headroom).
    vmem_a = int(1.5 * (2 * (C1 + C2) * thw * in_b
                        + 2 * cout_p * thw * inter_b
                        + 3 * cout_p * thw * 4
                        + 2 * 3 * cout_p * (C1 + C2 + 1) * 4
                        + 2 * cout_p * 4))
    vmem_a = min(max(vmem_a, 16 * 2**20), 64 * 2**20)
    vmem_b = int(1.5 * (2 * cout_p * thw * (inter_b + out_b)
                        + 4 * cout_p * (middle + 1) * 4))
    vmem_b = min(max(vmem_b, 16 * 2**20), 64 * 2**20)

    # --- pass 1: branches + sum_u + pooled average -----------------------------
    kern_a = functools.partial(_nsaf_branch_kernel, cout_p=cout_p,
                               hw_valid=HW, thw=thw, inv_hw=1.0 / HW)
    sum_u, pool = pl.pallas_call(
        kern_a,
        out_shape=(jax.ShapeDtypeStruct((N, cout_p, hw_pad), inter_dtype),
                   jax.ShapeDtypeStruct((N, cout_p, 1), jnp.float32)),
        grid_spec=pltpu.PrefetchScalarGridSpec(
            num_scalar_prefetch=0,
            grid=(N, num_t),
            in_specs=[
                pl.BlockSpec((None, C1, thw), lambda n, j: (n, 0, j)),
                pl.BlockSpec((None, C2, thw), lambda n, j: (n, 0, j)),
                pl.BlockSpec((3 * cout_p, C1), lambda n, j: (0, 0)),
                pl.BlockSpec((3 * cout_p, C2), lambda n, j: (0, 0)),
                pl.BlockSpec((3 * cout_p, 1), lambda n, j: (0, 0)),
            ],
            out_specs=[
                pl.BlockSpec((None, cout_p, thw), lambda n, j: (n, 0, j)),
                pl.BlockSpec((None, cout_p, 1), lambda n, j: (n, 0, 0)),
            ],
        ),
        compiler_params=pltpu.CompilerParams(
            dimension_semantics=("parallel", "arbitrary"),
            vmem_limit_bytes=vmem_a),
    )(x1f, x2f, wa, wb, b_stack)

    # --- pass 2: attention + rescale (cheap streaming sweep) -------------------
    out = pl.pallas_call(
        _nsaf_rescale_kernel,
        out_shape=jax.ShapeDtypeStruct((N, cout_p, hw_pad), out_dtype),
        grid_spec=pltpu.PrefetchScalarGridSpec(
            num_scalar_prefetch=0,
            grid=(N, num_t),
            in_specs=[
                pl.BlockSpec((None, cout_p, thw), lambda n, j: (n, 0, j)),
                pl.BlockSpec((None, cout_p, 1), lambda n, j: (n, 0, 0)),
                pl.BlockSpec((cout_p, middle), lambda n, j: (0, 0)),
                pl.BlockSpec((1, middle), lambda n, j: (0, 0)),
                pl.BlockSpec((cout_p, middle), lambda n, j: (0, 0)),
                pl.BlockSpec((cout_p, 1), lambda n, j: (0, 0)),
            ],
            out_specs=pl.BlockSpec((None, cout_p, thw), lambda n, j: (n, 0, j)),
        ),
        compiler_params=pltpu.CompilerParams(
            dimension_semantics=("parallel", "parallel"),
            vmem_limit_bytes=vmem_b),
    )(sum_u, pool, a1t, b1v, a2w, b2v)

    # Crop channel / spatial padding.
    return out[:, :cout, :HW].reshape(N, cout, H, W)


# ----------------------------------------------------------------------------
# Pure-JAX reference (mirrors the PyTorch forward, eval-mode BatchNorm)
# ----------------------------------------------------------------------------
def nsaf_reference(params, input1, input2):
    N, C1, H, W = input1.shape
    if input2.shape[2:] != (H, W):
        input2 = jax.image.resize(
            input2, (input2.shape[0], input2.shape[1], H, W), method="bilinear")
    x = jnp.concatenate([input1, input2], axis=1)

    def branch(w, bn):
        y = jnp.einsum("nchw,oc->nohw", x, w)
        gamma, beta, mean, var = bn
        scale = gamma / jnp.sqrt(var + 1e-5)
        y = (y - mean[None, :, None, None]) * scale[None, :, None, None] \
            + beta[None, :, None, None]
        return jnp.maximum(y, 0.0)

    x1 = branch(params["w1"], params["bn1"])
    x2 = branch(params["w2"], params["bn2"])
    x3 = branch(params["w3"], params["bn3"])

    sum_u = x1 + x2 + x3
    squeeze = jnp.mean(sum_u, axis=(2, 3))
    z = jnp.maximum(squeeze @ params["a1_w"].T + params["a1_b"], 0.0)
    a = z @ params["a2_w"].T + params["a2_b"]
    before = jnp.concatenate([a, a, a], axis=1)
    after = jax.nn.softmax(before, axis=1)
    cout = a.shape[1]
    a1 = after[:, 0:cout][:, :, None, None]
    a2 = after[:, cout:2 * cout][:, :, None, None]
    a3 = after[:, 2 * cout:3 * cout][:, :, None, None]
    return x1 * a1 + x2 * a2 + x3 * a3


# ----------------------------------------------------------------------------
if __name__ == "__main__":
    # in_channels = C1 + C2 = 8, out_channels = 4, middle = 2
    N, C1, C2, Cout, H, W = 2, 4, 4, 4, 16, 16
    middle = 2
    Cin = C1 + C2

    key = jax.random.PRNGKey(0)
    ks = jax.random.split(key, 12)

    input1 = jax.random.normal(ks[0], (N, C1, H, W), dtype=jnp.float32)
    input2 = jax.random.normal(ks[1], (N, C2, H // 2, W // 2), dtype=jnp.float32)

    def bn_params(k):
        k1, k2, k3, k4 = jax.random.split(k, 4)
        gamma = 1.0 + 0.1 * jax.random.normal(k1, (Cout,), dtype=jnp.float32)
        beta = 0.1 * jax.random.normal(k2, (Cout,), dtype=jnp.float32)
        mean = 0.1 * jax.random.normal(k3, (Cout,), dtype=jnp.float32)
        var = jnp.abs(1.0 + 0.1 * jax.random.normal(k4, (Cout,), dtype=jnp.float32))
        return (gamma, beta, mean, var)

    params = {
        # conv1/2/3: Conv2d(in_channels, out_channels, 1, bias=False);
        # dilation is irrelevant for 1x1 kernels.
        "w1": 0.3 * jax.random.normal(ks[2], (Cout, Cin), dtype=jnp.float32),
        "w2": 0.3 * jax.random.normal(ks[3], (Cout, Cin), dtype=jnp.float32),
        "w3": 0.3 * jax.random.normal(ks[4], (Cout, Cin), dtype=jnp.float32),
        "bn1": bn_params(ks[5]),
        "bn2": bn_params(ks[6]),
        "bn3": bn_params(ks[7]),
        # selective_kernel affine1/affine2
        "a1_w": 0.3 * jax.random.normal(ks[8], (middle, Cout), dtype=jnp.float32),
        "a1_b": 0.1 * jax.random.normal(ks[9], (middle,), dtype=jnp.float32),
        "a2_w": 0.3 * jax.random.normal(ks[10], (Cout, middle), dtype=jnp.float32),
        "a2_b": 0.1 * jax.random.normal(ks[11], (Cout,), dtype=jnp.float32),
    }

    ref = jax.block_until_ready(nsaf_reference(params, input1, input2))

    # f32 path: tight tolerance against the reference.
    out = jax.block_until_ready(
        nsaf_forward(params, input1, input2, compute_dtype=jnp.float32))
    assert out.shape == (N, Cout, H, W), out.shape
    err = float(jnp.max(jnp.abs(out - ref)))
    assert err < 1e-4, err

    # bf16 path (default, bandwidth-optimized): loose tolerance.
    out_bf16 = jax.block_until_ready(nsaf_forward(params, input1, input2))
    err_bf16 = float(jnp.max(jnp.abs(out_bf16.astype(jnp.float32) - ref)))
    assert err_bf16 < 3e-2, err_bf16

    print("KERNEL_OK")
</pallas_src>

<mosaic_0001>
module attributes {stable_mosaic.version = 11 : i64} {
  func.func @_nsaf_branch_kernel(%arg0: i32, %arg1: i32, %arg2: memref<1x4x256xf32, #tpu.memory_space<vmem>>, %arg3: memref<1x4x256xf32, #tpu.memory_space<vmem>>, %arg4: memref<24x4xf32, #tpu.memory_space<vmem>>, %arg5: memref<24x4xf32, #tpu.memory_space<vmem>>, %arg6: memref<24x1xf32, #tpu.memory_space<vmem>>, %arg7: memref<1x8x256xf32, #tpu.memory_space<vmem>>, %arg8: memref<1x8x1xf32, #tpu.memory_space<vmem>>) attributes {dimension_semantics = [#tpu.dimension_semantics<parallel>, #tpu.dimension_semantics<arbitrary>], iteration_bounds = array<i64: 2, 1>, scalar_prefetch = 0 : i64, scratch_operands = 0 : i64, tpu.core_type = #tpu.core_type<tc>, window_params = [{transform_indices = @transform_0, window_bounds = array<i64: 1, 4, 256>}, {transform_indices = @transform_1, window_bounds = array<i64: 1, 4, 256>}, {pipeline_mode = #tpu.pipeline_mode<synchronous>, transform_indices = @transform_2, window_bounds = array<i64: 24, 4>}, {pipeline_mode = #tpu.pipeline_mode<synchronous>, transform_indices = @transform_3, window_bounds = array<i64: 24, 4>}, {pipeline_mode = #tpu.pipeline_mode<synchronous>, transform_indices = @transform_4, window_bounds = array<i64: 24, 1>}, {transform_indices = @transform_5, window_bounds = array<i64: 1, 8, 256>}, {transform_indices = @transform_6, window_bounds = array<i64: 1, 8, 1>}]} {
    %c0_i32 = arith.constant 0 : i32
    %0 = arith.cmpi eq, %arg1, %c0_i32 : i32
    %1 = arith.extui %0 : i1 to i32
    %c0_i32_0 = arith.constant 0 : i32
    %2 = arith.cmpi ne, %1, %c0_i32_0 : i32
    scf.if %2 {
      %cst_28 = arith.constant 0.000000e+00 : f32
      %43 = vector.broadcast %cst_28 : f32 to vector<8x1xf32>
      %c0_29 = arith.constant 0 : index
      %c0_30 = arith.constant 0 : index
      %c0_31 = arith.constant 0 : index
      %44 = vector.load %arg8[%c0_29, %c0_30, %c0_31] : memref<1x8x1xf32, #tpu.memory_space<vmem>>, vector<1x8x1xf32>
      %45 = vector.shape_cast %44 : vector<1x8x1xf32> to vector<8x1xf32>
      %46 = vector.shape_cast %43 : vector<8x1xf32> to vector<1x8x1xf32>
      tpu.vector_store %arg8[%c0_29, %c0_30, %c0_31], %46 {strides = array<i32>} : memref<1x8x1xf32, #tpu.memory_space<vmem>>, vector<1x8x1xf32>,
    } else {
    }
    %c0 = arith.constant 0 : index
    %c0_1 = arith.constant 0 : index
    %3 = vector.load %arg4[%c0, %c0_1] : memref<24x4xf32, #tpu.memory_space<vmem>>, vector<24x4xf32>
    %c0_2 = arith.constant 0 : index
    %c0_3 = arith.constant 0 : index
    %c0_4 = arith.constant 0 : index
    %4 = vector.load %arg2[%c0_2, %c0_3, %c0_4] : memref<1x4x256xf32, #tpu.memory_space<vmem>>, vector<1x4x256xf32>
    %5 = vector.shape_cast %4 : vector<1x4x256xf32> to vector<4x256xf32>
    %cst = arith.constant dense<0.000000e+00> : vector<24x256xf32>
    %6 = tpu.matmul %3, %5, %cst {dimension_numbers = #tpu.dot_dimension_numbers<[1], [0], [0], [1], [0, 0, 1, 1], [], []>} : vector<24x4xf32>, vector<4x256xf32>, vector<24x256xf32> -> vector<24x256xf32>
    %c0_5 = arith.constant 0 : index
    %c0_6 = arith.constant 0 : index
    %7 = vector.load %arg5[%c0_5, %c0_6] : memref<24x4xf32, #tpu.memory_space<vmem>>, vector<24x4xf32>
    %c0_7 = arith.constant 0 : index
    %c0_8 = arith.constant 0 : index
    %c0_9 = arith.constant 0 : index
    %8 = vector.load %arg3[%c0_7, %c0_8, %c0_9] : memref<1x4x256xf32, #tpu.memory_space<vmem>>, vector<1x4x256xf32>
    %9 = vector.shape_cast %8 : vector<1x4x256xf32> to vector<4x256xf32>
    %cst_10 = arith.constant dense<0.000000e+00> : vector<24x256xf32>
    %10 = tpu.matmul %7, %9, %cst_10 {dimension_numbers = #tpu.dot_dimension_numbers<[1], [0], [0], [1], [0, 0, 1, 1], [], []>} : vector<24x4xf32>, vector<4x256xf32>, vector<24x256xf32> -> vector<24x256xf32>
    %11 = arith.addf %6, %10 : vector<24x256xf32>
    %c0_11 = arith.constant 0 : index
    %c0_12 = arith.constant 0 : index
    %12 = vector.load %arg6[%c0_11, %c0_12] : memref<24x1xf32, #tpu.memory_space<vmem>>, vector<24x1xf32>
    %13 = vector.broadcast %12 : vector<24x1xf32> to vector<24x256xf32>
    %14 = arith.addf %11, %13 : vector<24x256xf32>
    %cst_13 = arith.constant 0.000000e+00 : f32
    %15 = vector.broadcast %cst_13 : f32 to vector<24x256xf32>
    %16 = arith.maximumf %14, %15 : vector<24x256xf32>
    %17 = vector.extract_strided_slice %16 {offsets = [0, 0], sizes = [8, 256], strides = [1, 1]} : vector<24x256xf32> to vector<8x256xf32>
    %18 = vector.extract_strided_slice %16 {offsets = [8, 0], sizes = [8, 256], strides = [1, 1]} : vector<24x256xf32> to vector<8x256xf32>
    %19 = arith.addf %17, %18 : vector<8x256xf32>
    %20 = vector.extract_strided_slice %16 {offsets = [16, 0], sizes = [8, 256], strides = [1, 1]} : vector<24x256xf32> to vector<8x256xf32>
    %21 = arith.addf %19, %20 : vector<8x256xf32>
    %c0_14 = arith.constant 0 : index
    %c0_15 = arith.constant 0 : index
    %c0_16 = arith.constant 0 : index
    %22 = vector.load %arg7[%c0_14, %c0_15, %c0_16] : memref<1x8x256xf32, #tpu.memory_space<vmem>>, vector<1x8x256xf32>
    %23 = vector.shape_cast %22 : vector<1x8x256xf32> to vector<8x256xf32>
    %24 = vector.shape_cast %21 : vector<8x256xf32> to vector<1x8x256xf32>
    tpu.vector_store %arg7[%c0_14, %c0_15, %c0_16], %24 {strides = array<i32>} : memref<1x8x256xf32, #tpu.memory_space<vmem>>, vector<1x8x256xf32>,
    %25 = tpu.iota {dimensions = array<i32: 1>} : vector<8x256xi32>
    %c256_i32 = arith.constant 256 : i32
    %26 = arith.muli %arg1, %c256_i32 : i32
    %c256_i32_17 = arith.constant 256 : i32
    %27 = arith.subi %c256_i32_17, %26 : i32
    %28 = vector.broadcast %27 : i32 to vector<8x256xi32>
    %29 = arith.cmpi slt, %25, %28 : vector<8x256xi32>
    %cst_18 = arith.constant 0.000000e+00 : f32
    %30 = vector.broadcast %cst_18 : f32 to vector<8x256xf32>
    %31 = arith.select %29, %21, %30 : vector<8x256xi1>, vector<8x256xf32>
    %c0_19 = arith.constant 0 : index
    %c0_20 = arith.constant 0 : index
    %c0_21 = arith.constant 0 : index
    %32 = vector.load %arg8[%c0_19, %c0_20, %c0_21] : memref<1x8x1xf32, #tpu.memory_space<vmem>>, vector<1x8x1xf32>
    %33 = vector.shape_cast %32 : vector<1x8x1xf32> to vector<8x1xf32>
    %cst_22 = arith.constant dense<0.000000e+00> : vector<8xf32>
    %34 = vector.multi_reduction <add>, %31, %cst_22 [1] : vector<8x256xf32> to vector<8xf32>
    %35 = vector.shape_cast %34 : vector<8xf32> to vector<8x1xf32>
    %36 = arith.addf %33, %35 : vector<8x1xf32>
    %c0_23 = arith.constant 0 : index
    %c0_24 = arith.constant 0 : index
    %c0_25 = arith.constant 0 : index
    %37 = vector.load %arg8[%c0_23, %c0_24, %c0_25] : memref<1x8x1xf32, #tpu.memory_space<vmem>>, vector<1x8x1xf32>
    %38 = vector.shape_cast %37 : vector<1x8x1xf32> to vector<8x1xf32>
    %39 = vector.shape_cast %36 : vector<8x1xf32> to vector<1x8x1xf32>
    tpu.vector_store %arg8[%c0_23, %c0_24, %c0_25], %39 {strides = array<i32>} : memref<1x8x1xf32, #tpu.memory_space<vmem>>, vector<1x8x1xf32>,
    %c0_i32_26 = arith.constant 0 : i32
    %40 = arith.cmpi eq, %arg1, %c0_i32_26 : i32
    %41 = arith.extui %40 : i1 to i32
    %c0_i32_27 = arith.constant 0 : i32
    %42 = arith.cmpi ne, %41, %c0_i32_27 : i32
    scf.if %42 {
      %c0_28 = arith.constant 0 : index
      %c0_29 = arith.constant 0 : index
      %c0_30 = arith.constant 0 : index
      %43 = vector.load %arg8[%c0_28, %c0_29, %c0_30] : memref<1x8x1xf32, #tpu.memory_space<vmem>>, vector<1x8x1xf32>
      %44 = vector.shape_cast %43 : vector<1x8x1xf32> to vector<8x1xf32>
      %cst_31 = arith.constant 3.906250e-03 : f32
      %45 = vector.broadcast %cst_31 : f32 to vector<8x1xf32>
      %46 = arith.mulf %44, %45 : vector<8x1xf32>
      %c0_32 = arith.constant 0 : index
      %c0_33 = arith.constant 0 : index
      %c0_34 = arith.constant 0 : index
      %47 = vector.load %arg8[%c0_32, %c0_33, %c0_34] : memref<1x8x1xf32, #tpu.memory_space<vmem>>, vector<1x8x1xf32>
      %48 = vector.shape_cast %47 : vector<1x8x1xf32> to vector<8x1xf32>
      %49 = vector.shape_cast %46 : vector<8x1xf32> to vector<1x8x1xf32>
      tpu.vector_store %arg8[%c0_32, %c0_33, %c0_34], %49 {strides = array<i32>} : memref<1x8x1xf32, #tpu.memory_space<vmem>>, vector<1x8x1xf32>,
    } else {
    }
    return
  }
  func.func @transform_0(%arg0: i32, %arg1: i32) -> (i32, i32, i32) {
    %c0_i32 = arith.constant 0 : i32
    %c0_i32_0 = arith.constant 0 : i32
    return %arg0, %c0_i32, %arg1 : i32, i32, i32
  }
  func.func @transform_1(%arg0: i32, %arg1: i32) -> (i32, i32, i32) {
    %c0_i32 = arith.constant 0 : i32
    %c0_i32_0 = arith.constant 0 : i32
    return %arg0, %c0_i32, %arg1 : i32, i32, i32
  }
  func.func @transform_2(%arg0: i32, %arg1: i32) -> (i32, i32) {
    %c0_i32 = arith.constant 0 : i32
    %c0_i32_0 = arith.constant 0 : i32
    %c0_i32_1 = arith.constant 0 : i32
    return %c0_i32, %c0_i32_0 : i32, i32
  }
  func.func @transform_3(%arg0: i32, %arg1: i32) -> (i32, i32) {
    %c0_i32 = arith.constant 0 : i32
    %c0_i32_0 = arith.constant 0 : i32
    %c0_i32_1 = arith.constant 0 : i32
    return %c0_i32, %c0_i32_0 : i32, i32
  }
  func.func @transform_4(%arg0: i32, %arg1: i32) -> (i32, i32) {
    %c0_i32 = arith.constant 0 : i32
    %c0_i32_0 = arith.constant 0 : i32
    %c0_i32_1 = arith.constant 0 : i32
    return %c0_i32, %c0_i32_0 : i32, i32
  }
  func.func @transform_5(%arg0: i32, %arg1: i32) -> (i32, i32, i32) {
    %c0_i32 = arith.constant 0 : i32
    %c0_i32_0 = arith.constant 0 : i32
    return %arg0, %c0_i32, %arg1 : i32, i32, i32
  }
  func.func @transform_6(%arg0: i32, %arg1: i32) -> (i32, i32, i32) {
    %c0_i32 = arith.constant 0 : i32
    %c0_i32_0 = arith.constant 0 : i32
    %c0_i32_1 = arith.constant 0 : i32
    return %arg0, %c0_i32, %c0_i32_0 : i32, i32, i32
  }
}

</mosaic_0001>

<llo_original>
// kernel: tpu_custom_call.1
$region0: #{tpu_custom_call.1}
  #allocation0 [shape = 'u32[]', space=smem, size = 0x4, offset = 0x4, fixed_abs, tag = 'smem constant byte address 0x4 - core index']
  #allocation1 [shape = 'u32[144,128]{1,0:T(1,128)}', space=vmem, size = 0x12000, scoped, tag = 'internal scratch']
  %s0 = inlined_call_operand.vmem [shape: f32[2,4,256], index: 0, kind: input, shape index: {}]
  %s1 = inlined_call_operand.vmem [shape: f32[2,4,256], index: 1, kind: input, shape index: {}]
  %s2 = inlined_call_operand.vmem [shape: f32[24,4], index: 2, kind: input, shape index: {}]
  %s3 = inlined_call_operand.vmem [shape: f32[24,4], index: 3, kind: input, shape index: {}]
  %s4 = inlined_call_operand.vmem [shape: f32[24,1], index: 4, kind: input, shape index: {}]
  %s5 = inlined_call_operand.hbm [shape: f32[2,8,256], index: 5, kind: output, shape index: {0}]
  %s6 = inlined_call_operand.vmem [shape: f32[2,8,1], index: 6, kind: output, shape index: {1}]
  %7 = xla_tuple %s5, %s6
  %s8 = sld [smem:[#allocation0]]
  $region69: #{tpu_custom_call.1} parent=0
    _
  %s10 = ssub.s32 1, %s8
  %s11 = scalar_select 0, %s10, %s8
  $region1: #{tpu_custom_call.1} parent=0
    #allocation2 [shape = 'u8[16384]{0}', space=vmem, size = 0x4000, scoped, tag = 'output window, operand 0']
    #allocation3 [shape = 's32[2]{0}', space=sflag, size = 0x8, scoped, tag = 'scoped memory for tpu_custom_call.1']
    %12 = vsyncpa [#allocation3], 0
    %s13 = scalar_lea.sflag [#allocation3], 1
    %14 = vsyncpa %s13, 0
    loop: start=0, step=1, limit=4
    $region2: #{tpu_custom_call.1} parent=1 // loop_pre_header
      _
    $region3: #{tpu_custom_call.1} parent=1 // loop_header
      %s16 = sphi 0, %s20
      %p17 = scmp.ge.s32.totalorder %s16, 4
      %s23 = sphi 0, %s35
      %s24 = sphi 0, %s31
      %s25 = sphi 0, %s23
      %s26 = sphi 0, %s24
      %s27 = sphi 0, %s25
      %s28 = sphi 0, %s26
      %s40 = sphi 0, %s42
      %s43 = sphi 0, %s40
      %s44 = sphi 0, %s43
      %s60 = sphi 0, %s44
      %s68 = sphi 0, %s70
      %s71 = sphi 0, %s68
      %s72 = sphi 0, %s71
      %s88 = sphi 0, %s72
      %s92 = sphi 0, %s92
      %s94 = sphi 0, %s92
      %s95 = sphi 0, %s94
      %s109 = sphi 0, %s95
      %s113 = sphi 0, %s113
      %s115 = sphi 0, %s113
      %s116 = sphi 0, %s115
      %s130 = sphi 0, %s116
      %s134 = sphi 0, %s134
      %s136 = sphi 0, %s134
      %s137 = sphi 0, %s136
      %s151 = sphi 0, %s137
      %s159 = sphi 0, %s161
      %s162 = sphi 0, %s159
      %s163 = sphi 0, %s162
      %s179 = sphi 0, %s163
      %s185 = sphi 0, %s187
      %s188 = sphi 0, %s185
      %s189 = sphi 0, %s188
      %s205 = sphi 0, %s189
    $region4: #{tpu_custom_call.1} parent=1 // loop_header_branch
      %19 = sbr.rel (%p17) target = $region8
    $region5: #{tpu_custom_call.1} parent=1 // loop_body
      %s21 = ssub.s32 %s16, 1
      %s22 = ssub.s32 %s16, 2
      %s29 = sadd.s32 1, %s24
      %p30 = scmp.ge.s32.totalorder %s29, 1
      %s31 = scalar_select %p30, 0, %s29
      %s32 = sadd.s32 1, %s23
      %s33 = scalar_select %p30, %s32, %s23
      %p34 = scmp.ge.s32.totalorder %s33, 2
      %s35 = scalar_select %p34, 0, %s33
      %s36 = ssub.s32 %s23, %s35
      %s37 = ssub.s32 %s24, %s31
      %s38 = sor.u32 %s36, %s37
      %p39 = scmp.eq.s32.totalorder %s38, 0
      %s41 = sadd.s32 %s40, 1
      %s42 = scalar_select %p39, %s40, %s41
      %p45 = pneg %p39
      %p46 = scmp.eq.s32.totalorder %s16, 1
      %p47 = por %p45, %p46
      %p48 = scmp.ne.s32.totalorder %s40, %s43
      %p49 = scmp.eq.s32.totalorder %s16, 0
      %p50 = por %p48, %p49
      %p51 = scmp.ne.s32.totalorder %s40, %s43
      %p52 = scmp.eq.s32.totalorder %s21, 1
      %p53 = por %p51, %p52
      %p54 = scmp.ne.s32.totalorder %s43, %s44
      %p55 = scmp.eq.s32.totalorder %s21, 0
      %p56 = por %p54, %p55
      %p57 = scmp.ne.s32.totalorder %s43, %s44
      %p58 = scmp.eq.s32.totalorder %s22, 1
      %p59 = por %p57, %p58
      %p61 = scmp.ne.s32.totalorder %s44, %s60
      %p62 = scmp.eq.s32.totalorder %s22, 0
      %p63 = por %p61, %p62
      %s64 = ssub.s32 %s23, %s35
      %s65 = ssub.s32 %s24, %s31
      %s66 = sor.u32 %s64, %s65
      %p67 = scmp.eq.s32.totalorder %s66, 0
      %s69 = sadd.s32 %s68, 1
      %s70 = scalar_select %p67, %s68, %s69
      %p73 = pneg %p67
      %p74 = scmp.eq.s32.totalorder %s16, 1
      %p75 = por %p73, %p74
      %p76 = scmp.ne.s32.totalorder %s68, %s71
      %p77 = scmp.eq.s32.totalorder %s16, 0
      %p78 = por %p76, %p77
      %p79 = scmp.ne.s32.totalorder %s68, %s71
      %p80 = scmp.eq.s32.totalorder %s21, 1
      %p81 = por %p79, %p80
      %p82 = scmp.ne.s32.totalorder %s71, %s72
      %p83 = scmp.eq.s32.totalorder %s21, 0
      %p84 = por %p82, %p83
      %p85 = scmp.ne.s32.totalorder %s71, %s72
      %p86 = scmp.eq.s32.totalorder %s22, 1
      %p87 = por %p85, %p86
      %p89 = scmp.ne.s32.totalorder %s72, %s88
      %p90 = scmp.eq.s32.totalorder %s22, 0
      %p91 = por %p89, %p90
      %s93 = sadd.s32 %s92, 1
      %p96 = scmp.eq.s32.totalorder %s16, 1
      %p97 = scmp.ne.s32.totalorder %s92, %s94
      %p98 = scmp.eq.s32.totalorder %s16, 0
      %p99 = por %p97, %p98
      %p100 = scmp.ne.s32.totalorder %s92, %s94
      %p101 = scmp.eq.s32.totalorder %s21, 1
      %p102 = por %p100, %p101
      %p103 = scmp.ne.s32.totalorder %s94, %s95
      %p104 = scmp.eq.s32.totalorder %s21, 0
      %p105 = por %p103, %p104
      %p106 = scmp.ne.s32.totalorder %s94, %s95
      %p107 = scmp.eq.s32.totalorder %s22, 1
      %p108 = por %p106, %p107
      %p110 = scmp.ne.s32.totalorder %s95, %s109
      %p111 = scmp.eq.s32.totalorder %s22, 0
      %p112 = por %p110, %p111
      %s114 = sadd.s32 %s113, 1
      %p117 = scmp.eq.s32.totalorder %s16, 1
      %p118 = scmp.ne.s32.totalorder %s113, %s115
      %p119 = scmp.eq.s32.totalorder %s16, 0
      %p120 = por %p118, %p119
      %p121 = scmp.ne.s32.totalorder %s113, %s115
      %p122 = scmp.eq.s32.totalorder %s21, 1
      %p123 = por %p121, %p122
      %p124 = scmp.ne.s32.totalorder %s115, %s116
      %p125 = scmp.eq.s32.totalorder %s21, 0
      %p126 = por %p124, %p125
      %p127 = scmp.ne.s32.totalorder %s115, %s116
      %p128 = scmp.eq.s32.totalorder %s22, 1
      %p129 = por %p127, %p128
      %p131 = scmp.ne.s32.totalorder %s116, %s130
      %p132 = scmp.eq.s32.totalorder %s22, 0
      %p133 = por %p131, %p132
      %s135 = sadd.s32 %s134, 1
      %p138 = scmp.eq.s32.totalorder %s16, 1
      %p139 = scmp.ne.s32.totalorder %s134, %s136
      %p140 = scmp.eq.s32.totalorder %s16, 0
      %p141 = por %p139, %p140
      %p142 = scmp.ne.s32.totalorder %s134, %s136
      %p143 = scmp.eq.s32.totalorder %s21, 1
      %p144 = por %p142, %p143
      %p145 = scmp.ne.s32.totalorder %s136, %s137
      %p146 = scmp.eq.s32.totalorder %s21, 0
      %p147 = por %p145, %p146
      %p148 = scmp.ne.s32.totalorder %s136, %s137
      %p149 = scmp.eq.s32.totalorder %s22, 1
      %p150 = por %p148, %p149
      %p152 = scmp.ne.s32.totalorder %s137, %s151
      %p153 = scmp.eq.s32.totalorder %s22, 0
      %p154 = por %p152, %p153
      %s155 = ssub.s32 %s23, %s35
      %s156 = ssub.s32 %s24, %s31
      %s157 = sor.u32 %s155, %s156
      %p158 = scmp.eq.s32.totalorder %s157, 0
      %s160 = sadd.s32 %s159, 1
      %s161 = scalar_select %p158, %s159, %s160
      %p164 = pneg %p158
      %p165 = scmp.eq.s32.totalorder %s16, 1
      %p166 = por %p164, %p165
      %p167 = scmp.ne.s32.totalorder %s159, %s162
      %p168 = scmp.eq.s32.totalorder %s16, 0
      %p169 = por %p167, %p168
      %p170 = scmp.ne.s32.totalorder %s159, %s162
      %p171 = scmp.eq.s32.totalorder %s21, 1
      %p172 = por %p170, %p171
      %p173 = scmp.ne.s32.totalorder %s162, %s163
      %p174 = scmp.eq.s32.totalorder %s21, 0
      %p175 = por %p173, %p174
      %p176 = scmp.ne.s32.totalorder %s162, %s163
      %p177 = scmp.eq.s32.totalorder %s22, 1
      %p178 = por %p176, %p177
      %p180 = scmp.ne.s32.totalorder %s163, %s179
      %p181 = scmp.eq.s32.totalorder %s22, 0
      %p182 = por %p180, %p181
      %s183 = ssub.s32 %s23, %s35
      %p184 = scmp.eq.s32.totalorder %s183, 0
      %s186 = sadd.s32 %s185, 1
      %s187 = scalar_select %p184, %s185, %s186
      %p190 = pneg %p184
      %p191 = scmp.eq.s32.totalorder %s16, 1
      %p192 = por %p190, %p191
      %p193 = scmp.ne.s32.totalorder %s185, %s188
      %p194 = scmp.eq.s32.totalorder %s16, 0
      %p195 = por %p193, %p194
      %p196 = scmp.ne.s32.totalorder %s185, %s188
      %p197 = scmp.eq.s32.totalorder %s21, 1
      %p198 = por %p196, %p197
      %p199 = scmp.ne.s32.totalorder %s188, %s189
      %p200 = scmp.eq.s32.totalorder %s21, 0
      %p201 = por %p199, %p200
      %p202 = scmp.ne.s32.totalorder %s188, %s189
      %p203 = scmp.eq.s32.totalorder %s22, 1
      %p204 = por %p202, %p203
      %p206 = scmp.ne.s32.totalorder %s189, %s205
      %p207 = scmp.eq.s32.totalorder %s22, 0
      %p208 = por %p206, %p207
      %p209 = scmp.le.s32.totalorder 1, %s16
      %p210 = scmp.lt.s32.totalorder %s16, 3
      %p211 = pnand %p209, %p210
      %p212 = pneg %p211
      // Predicated region
      $region9: #{tpu_custom_call.1} parent=5 // pred_check
        _
      $region10: #{tpu_custom_call.1} parent=5 // pred_check_branch
        %214 = sbr.rel (%p211) target = $region12
      $region11: #{tpu_custom_call.1} parent=5 // pred_region
        %s215 = ssub.s32 %s16, 1
        // Predicated region
        $region13: #{tpu_custom_call.1} parent=11 // pred_check
          %p216 = pneg %p105
        $region14: #{tpu_custom_call.1} parent=11 // pred_check_branch
          %218 = sbr.rel (%p216) target = $region16
        $region15: #{tpu_custom_call.1} parent=11 // pred_region
          _
        $region16: #{tpu_custom_call.1} parent=11 // pred_fallthru
          _
        // Predicated region
        $region17: #{tpu_custom_call.1} parent=11 // pred_check
          %p219 = pneg %p126
        $region18: #{tpu_custom_call.1} parent=11 // pred_check_branch
          %221 = sbr.rel (%p219) target = $region20
        $region19: #{tpu_custom_call.1} parent=11 // pred_region
          _
        $region20: #{tpu_custom_call.1} parent=11 // pred_fallthru
          _
        // Predicated region
        $region21: #{tpu_custom_call.1} parent=11 // pred_check
          %p222 = pneg %p147
        $region22: #{tpu_custom_call.1} parent=11 // pred_check_branch
          %224 = sbr.rel (%p222) target = $region24
        $region23: #{tpu_custom_call.1} parent=11 // pred_region
          _
        $region24: #{tpu_custom_call.1} parent=11 // pred_fallthru
          _
      $region12: #{tpu_custom_call.1} parent=5 // pred_fallthru
        _
      %p225 = scmp.lt.s32.totalorder %s16, 2
      // Predicated region
      $region25: #{tpu_custom_call.1} parent=5 // pred_check
        %p226 = pneg %p225
      $region26: #{tpu_custom_call.1} parent=5 // pred_check_branch
        %228 = sbr.rel (%p226) target = $region28
      $region27: #{tpu_custom_call.1} parent=5 // pred_region
        // Predicated region
        $region29: #{tpu_custom_call.1} parent=27 // pred_check
          %p229 = pneg %p50
        $region30: #{tpu_custom_call.1} parent=27 // pred_check_branch
          %231 = sbr.rel (%p229) target = $region32
        $region31: #{tpu_custom_call.1} parent=27 // pred_region
          %s232 = smul.u32 2, %s24
          %p233 = scmp.lt.s32.totalorder %s23, 1
          %s234 = scalar_select %p233, %s23, 1
          %p235 = scmp.lt.s32.totalorder %s232, 1
          %s236 = scalar_select %p235, %s232, 1
          %s237 = smul.addr %s234, 2
          %s238 = sadd.s32 %s236, %s237
          %s239 = smul.addr %s238, 4
          %s240 = scalar_lea.vmem %s0, %s239
          %s241 = smul.u32 2, %s24
        $region32: #{tpu_custom_call.1} parent=27 // pred_fallthru
          _
        // Predicated region
        $region33: #{tpu_custom_call.1} parent=27 // pred_check
          %p242 = pneg %p78
        $region34: #{tpu_custom_call.1} parent=27 // pred_check_branch
          %244 = sbr.rel (%p242) target = $region36
        $region35: #{tpu_custom_call.1} parent=27 // pred_region
          %s245 = smul.u32 2, %s24
          %p246 = scmp.lt.s32.totalorder %s23, 1
          %s247 = scalar_select %p246, %s23, 1
          %p248 = scmp.lt.s32.totalorder %s245, 1
          %s249 = scalar_select %p248, %s245, 1
          %s250 = smul.addr %s247, 2
          %s251 = sadd.s32 %s249, %s250
          %s252 = smul.addr %s251, 4
          %s253 = scalar_lea.vmem %s1, %s252
          %s254 = smul.u32 2, %s24
        $region36: #{tpu_custom_call.1} parent=27 // pred_fallthru
          _
      $region28: #{tpu_custom_call.1} parent=5 // pred_fallthru
        _
      %p255 = scmp.le.s32.totalorder 1, %s16
      %p256 = scmp.lt.s32.totalorder %s16, 3
      %p257 = pnand %p255, %p256
      %p258 = pneg %p257
      // Predicated region
      $region37: #{tpu_custom_call.1} parent=5 // pred_check
        _
      $region38: #{tpu_custom_call.1} parent=5 // pred_check_branch
        %260 = sbr.rel (%p257) target = $region40
      $region39: #{tpu_custom_call.1} parent=5 // pred_region
        %s261 = ssub.s32 %s16, 1
        %s262 = smul.u32 2, %s26
        %p263 = scmp.lt.s32.totalorder %s25, 1
        %s264 = scalar_select %p263, %s25, 1
        %p265 = scmp.lt.s32.totalorder %s262, 1
        %s266 = scalar_select %p265, %s262, 1
        %s267 = smul.addr %s264, 2
        %s268 = sadd.s32 %s266, %s267
        %s269 = smul.addr %s268, 4
        %s270 = scalar_lea.vmem %s0, %s269
        %p271 = pneg %p56
        %p272 = pneg %p53
        %s273 = smul.u32 2, %s26
        %p274 = scmp.lt.s32.totalorder %s25, 1
        %s275 = scalar_select %p274, %s25, 1
        %p276 = scmp.lt.s32.totalorder %s273, 1
        %s277 = scalar_select %p276, %s273, 1
        %s278 = smul.addr %s275, 2
        %s279 = sadd.s32 %s277, %s278
        %s280 = smul.addr %s279, 4
        %s281 = scalar_lea.vmem %s1, %s280
        %p282 = pneg %p84
        %p283 = pneg %p81
        %p284 = pneg %p105
        %p285 = pneg %p102
        %p286 = pneg %p126
        %p287 = pneg %p123
        %p288 = pneg %p147
        %p289 = pneg %p144
        %p290 = pneg %p175
        %p291 = pneg %p172
        %s292 = sand.u32 %s162, 1
        %s293 = scalar_lea.sflag [#allocation3], %s292
        %s294 = sand.u32 %s162, 1
        %s295 = smul.addr %s294, 16
        %s296 = scalar_lea.vmem [#allocation2], %s295
        %p297 = pneg %p201
        %p298 = pneg %p198
        %p299 = scmp.lt.s32.totalorder %s25, 1
        %s300 = scalar_select %p299, %s25, 1
        %s301 = smul.addr %s300, 8
        %s302 = scalar_lea.vmem %s6, %s301
        %s303 = smul.u32 2, %s26
        %p304 = scmp.lt.s32.totalorder %s25, 1
        %s305 = scalar_select %p304, %s25, 1
        %p306 = scmp.lt.s32.totalorder %s303, 1
        %s307 = scalar_select %p306, %s303, 1
        %s308 = smul.addr %s305, 2
        %s309 = sadd.s32 %s307, %s308
        %s310 = smul.addr %s309, 4
        %s311 = scalar_lea.vmem %s0, %s310
        %s312 = smul.u32 2, %s26
        %s313 = smul.u32 2, %s26
        %p314 = scmp.lt.s32.totalorder %s25, 1
        %s315 = scalar_select %p314, %s25, 1
        %p316 = scmp.lt.s32.totalorder %s313, 1
        %s317 = scalar_select %p316, %s313, 1
        %s318 = smul.addr %s315, 2
        %s319 = sadd.s32 %s317, %s318
        %s320 = smul.addr %s319, 4
        %s321 = scalar_lea.vmem %s1, %s320
        %s322 = smul.u32 2, %s26
        %s323 = smul.u32 2, %s26
        %p324 = scmp.lt.s32.totalorder %s25, 1
        %s325 = scalar_select %p324, %s25, 1
        %s326 = smul.addr %s325, 8
        %s327 = scalar_lea.vmem %s6, %s326
        %p328 = scmp.eq.s32.totalorder %s26, 0
        // Predicated region
        $region41: #{tpu_custom_call.1} parent=39 // pred_check
          %p329 = pneg %p328
        $region42: #{tpu_custom_call.1} parent=39 // pred_check_branch
          %331 = sbr.rel (%p329) target = $region44
        $region43: #{tpu_custom_call.1} parent=39 // pred_region
          %vm332 = vcmask 7168
          %333 = vst.msk [vmem:[%s327] sm:$0xff] %vm332, 0.0
        $region44: #{tpu_custom_call.1} parent=39 // pred_fallthru
          _
        %v334 = vld [vmem:[%s2] sm:$0xff]
        %v335 = vld [vmem:[%s2 + $0x8] sm:$0xff]
        %v336 = vld [vmem:[%s2 + $0x10] sm:$0xff]
        %v337 = vld [vmem:[%s311] sm:$0xff]
        %v338 = vld [vmem:[%s3] sm:$0xff]
        %v339 = vld [vmem:[%s3 + $0x8] sm:$0xff]
        %v340 = vld [vmem:[%s3 + $0x10] sm:$0xff]
        %v341 = vld [vmem:[%s321] sm:$0xff]
        %v343 = vcombine.high %v341, %v341
        %vm344 = vcmask 31744
        %v346 = vsel %vm344, %v338, 0
        %v349 = vsel %vm344, %v339, 0
        %v352 = vsel %vm344, %v340, 0
        %vm354 = vcmask 1043456
        %v355 = vsel %vm354, %v341, 0
        %v357 = vsel %vm354, %v343, 0
        %359 = vmatprep.subr.mxu0 0.0
        %360 = vmatpush1.msra.mxu0 0.0
        %361 = vmatprep.subr.mxu0 0.0
        %362 = vmatpush1.msra.mxu0 0.0
        %363 = vmatprep.subr.mxu0 0.0
        %364 = vmatpush1.msra.mxu0 0.0
        %365 = vmatprep.subr.mxu0 0.0
        %366 = vmatpush1.msra.mxu0 0.0
        %367 = vmatprep.subr.mxu0 0.0
        %368 = vmatpush1.msra.mxu0 0.0
        %369 = vmatprep.subr.mxu0 0.0
        %370 = vmatpush1.msra.mxu0 0.0
        %371 = vmatprep.subr.mxu0 0.0
        %372 = vmatpush1.msra.mxu0 0.0
        %373 = vmatprep.subr.mxu0 0.0
        %374 = vmatpush1.msra.mxu0 0.0
        %375 = vmatprep.subr.mxu0 0.0
        %376 = vmatpush1.msra.mxu0 0.0
        %377 = vmatprep.subr.mxu0 0.0
        %378 = vmatpush1.msra.mxu0 0.0
        %379 = vmatprep.subr.mxu0 0.0
        %380 = vmatpush1.msra.mxu0 0.0
        %381 = vmatprep.subr.mxu0 0.0
        %382 = vmatpush1.msra.mxu0 0.0
        %383 = vmatprep.subr.mxu0 0.0
        %384 = vmatpush1.msra.mxu0 0.0
        %385 = vmatprep.subr.mxu0 0.0
        %386 = vmatpush1.msra.mxu0 0.0
        %387 = vmatprep.subr.mxu0 0.0
        %388 = vmatpush1.msra.mxu0 0.0
        %389 = vmatprep.subr.mxu0 %v357
        %390 = vmatpush1.msra.mxu0 %v355
        %391 = vmatprep.subr.mxu0 0.0
        %392 = vmatpush2.msra.mxu0 0.0
        %393 = vmatprep.subr.mxu0 0.0
        %394 = vmatpush2.msra.mxu0 0.0
        %395 = vmatprep.subr.mxu0 0.0
        %396 = vmatpush2.msra.mxu0 0.0
        %397 = vmatprep.subr.mxu0 0.0
        %398 = vmatpush2.msra.mxu0 0.0
        %399 = vmatprep.subr.mxu0 0.0
        %400 = vmatpush2.msra.mxu0 0.0
        %401 = vmatprep.subr.mxu0 0.0
        %402 = vmatpush2.msra.mxu0 0.0
        %403 = vmatprep.subr.mxu0 0.0
        %404 = vmatpush2.msra.mxu0 0.0
        %405 = vmatprep.subr.mxu0 0.0
        %406 = vmatpush2.msra.mxu0 0.0
        %407 = vmatprep.subr.mxu0 0.0
        %408 = vmatpush2.msra.mxu0 0.0
        %409 = vmatprep.subr.mxu0 0.0
        %410 = vmatpush2.msra.mxu0 0.0
        %411 = vmatprep.subr.mxu0 0.0
        %412 = vmatpush2.msra.mxu0 0.0
        %413 = vmatprep.subr.mxu0 0.0
        %414 = vmatpush2.msra.mxu0 0.0
        %415 = vmatprep.subr.mxu0 0.0
        %416 = vmatpush2.msra.mxu0 0.0
        %417 = vmatprep.subr.mxu0 0.0
        %418 = vmatpush2.msra.mxu0 0.0
        %419 = vmatprep.subr.mxu0 0.0
        %420 = vmatpush2.msra.mxu0 0.0
        %421 = vmatprep.subr.mxu0 0.0
        %422 = vmatpush2.msra.mxu0 0.0
        %423 = vmatprep.mubr.f32.mxu0 0.0
        %424 = vmatmul.mubr.f32.gmra.mxu0 %v346
        %v425 = vpop.f32.mrf.mxu0
        %v426 = vadd.f32 0.0, %v425
        %v427 = vpop.f32.mrf.mxu0
        %v428 = vadd.f32 0.0, %v427
        %429 = vmatprep.mubr.f32.mxu0 0.0
        %430 = vmatmul.mubr.f32.gmra.mxu0 %v349
        %v431 = vpop.f32.mrf.mxu0
        %v432 = vadd.f32 0.0, %v431
        %v433 = vpop.f32.mrf.mxu0
        %v434 = vadd.f32 0.0, %v433
        %435 = vmatprep.mubr.f32.mxu0 0.0
        %436 = vmatmul.mubr.f32.gmra.mxu0 %v352
        %v437 = vpop.f32.mrf.mxu0
        %v438 = vadd.f32 0.0, %v437
        %v439 = vpop.f32.mrf.mxu0
        %v440 = vadd.f32 0.0, %v439
        %441 = vdwg.mxu0
        %v443 = vcombine.high %v337, %v337
        %v445 = vsel %vm344, %v334, 0
        %v448 = vsel %vm344, %v335, 0
        %v451 = vsel %vm344, %v336, 0
        %v453 = vsel %vm354, %v337, 0
        %v455 = vsel %vm354, %v443, 0
        %457 = vmatprep.subr.mxu0 0.0
        %458 = vmatpush1.msra.mxu0 0.0
        %459 = vmatprep.subr.mxu0 0.0
        %460 = vmatpush1.msra.mxu0 0.0
        %461 = vmatprep.subr.mxu0 0.0
        %462 = vmatpush1.msra.mxu0 0.0
        %463 = vmatprep.subr.mxu0 0.0
        %464 = vmatpush1.msra.mxu0 0.0
        %465 = vmatprep.subr.mxu0 0.0
        %466 = vmatpush1.msra.mxu0 0.0
        %467 = vmatprep.subr.mxu0 0.0
        %468 = vmatpush1.msra.mxu0 0.0
        %469 = vmatprep.subr.mxu0 0.0
        %470 = vmatpush1.msra.mxu0 0.0
        %471 = vmatprep.subr.mxu0 0.0
        %472 = vmatpush1.msra.mxu0 0.0
        %473 = vmatprep.subr.mxu0 0.0
        %474 = vmatpush1.msra.mxu0 0.0
        %475 = vmatprep.subr.mxu0 0.0
        %476 = vmatpush1.msra.mxu0 0.0
        %477 = vmatprep.subr.mxu0 0.0
        %478 = vmatpush1.msra.mxu0 0.0
        %479 = vmatprep.subr.mxu0 0.0
        %480 = vmatpush1.msra.mxu0 0.0
        %481 = vmatprep.subr.mxu0 0.0
        %482 = vmatpush1.msra.mxu0 0.0
        %483 = vmatprep.subr.mxu0 0.0
        %484 = vmatpush1.msra.mxu0 0.0
        %485 = vmatprep.subr.mxu0 0.0
        %486 = vmatpush1.msra.mxu0 0.0
        %487 = vmatprep.subr.mxu0 %v455
        %488 = vmatpush1.msra.mxu0 %v453
        %489 = vmatprep.subr.mxu0 0.0
        %490 = vmatpush2.msra.mxu0 0.0
        %491 = vmatprep.subr.mxu0 0.0
        %492 = vmatpush2.msra.mxu0 0.0
        %493 = vmatprep.subr.mxu0 0.0
        %494 = vmatpush2.msra.mxu0 0.0
        %495 = vmatprep.subr.mxu0 0.0
        %496 = vmatpush2.msra.mxu0 0.0
        %497 = vmatprep.subr.mxu0 0.0
        %498 = vmatpush2.msra.mxu0 0.0
        %499 = vmatprep.subr.mxu0 0.0
        %500 = vmatpush2.msra.mxu0 0.0
        %501 = vmatprep.subr.mxu0 0.0
        %502 = vmatpush2.msra.mxu0 0.0
        %503 = vmatprep.subr.mxu0 0.0
        %504 = vmatpush2.msra.mxu0 0.0
        %505 = vmatprep.subr.mxu0 0.0
        %506 = vmatpush2.msra.mxu0 0.0
        %507 = vmatprep.subr.mxu0 0.0
        %508 = vmatpush2.msra.mxu0 0.0
        %509 = vmatprep.subr.mxu0 0.0
        %510 = vmatpush2.msra.mxu0 0.0
        %511 = vmatprep.subr.mxu0 0.0
        %512 = vmatpush2.msra.mxu0 0.0
        %513 = vmatprep.subr.mxu0 0.0
        %514 = vmatpush2.msra.mxu0 0.0
        %515 = vmatprep.subr.mxu0 0.0
        %516 = vmatpush2.msra.mxu0 0.0
        %517 = vmatprep.subr.mxu0 0.0
        %518 = vmatpush2.msra.mxu0 0.0
        %519 = vmatprep.subr.mxu0 0.0
        %520 = vmatpush2.msra.mxu0 0.0
        %521 = vmatprep.mubr.f32.mxu0 0.0
        %522 = vmatmul.mubr.f32.gmra.mxu0 %v445
        %v523 = vpop.f32.mrf.mxu0
        %v524 = vadd.f32 %v426, %v523
        %v525 = vpop.f32.mrf.mxu0
        %v526 = vadd.f32 %v428, %v525
        %527 = vmatprep.mubr.f32.mxu0 0.0
        %528 = vmatmul.mubr.f32.gmra.mxu0 %v448
        %v529 = vpop.f32.mrf.mxu0
        %v530 = vadd.f32 %v432, %v529
        %v531 = vpop.f32.mrf.mxu0
        %v532 = vadd.f32 %v434, %v531
        %533 = vmatprep.mubr.f32.mxu0 0.0
        %534 = vmatmul.mubr.f32.gmra.mxu0 %v451
        %v535 = vpop.f32.mrf.mxu0
        %v536 = vadd.f32 %v438, %v535
        %v537 = vpop.f32.mrf.mxu0
        %v538 = vadd.f32 %v440, %v537
        %539 = vdwg.mxu0
        %v540 = vld [vmem:[%s4] sm:$0xff]
        %v541 = vld [vmem:[%s4 + $0x8] sm:$0xff]
        %v542 = vld [vmem:[%s4 + $0x10] sm:$0xff]
        %544 = vset.pattern.permute.xlu0 0
        %545 = vperm.xlu0 %544, %v540
        %v546 = vpop.permute.xlu0 %545
        %549 = vset.pattern.permute.xlu0 0
        %550 = vperm.xlu0 %549, %v541
        %v551 = vpop.permute.xlu0 %550
        %554 = vset.pattern.permute.xlu0 0
        %555 = vperm.xlu0 %554, %v542
        %v556 = vpop.permute.xlu0 %555
        %v558 = vadd.f32 %v524, %v546
        %v559 = vadd.f32 %v526, %v546
        %v560 = vadd.f32 %v530, %v551
        %v561 = vadd.f32 %v532, %v551
        %v562 = vadd.f32 %v536, %v556
        %v563 = vadd.f32 %v538, %v556
        %v564 = vmax.f32 %v558, 0.0
        %v565 = vmax.f32 %v559, 0.0
        %v566 = vmax.f32 %v560, 0.0
        %v567 = vmax.f32 %v561, 0.0
        %v568 = vmax.f32 %v562, 0.0
        %v569 = vmax.f32 %v563, 0.0
        %v570 = vadd.f32 %v564, %v566
        %v571 = vadd.f32 %v565, %v567
        %v572 = vadd.f32 %v570, %v568
        %v573 = vadd.f32 %v571, %v569
        %574 = vst [vmem:[%s296] sm:$0xff] %v572
        %575 = vst [vmem:[%s296 + $0x8] sm:$0xff] %v573
        %v576 = vlaneseq
        %v577 = vand.u32 %v576, 127
        %v578 = vadd.s32 %v577, 128
        %s579 = smul.u32 %s26, 256
        %s580 = ssub.s32 256, %s579
        %v581 = vstv %s580
        %vm582 = vcmp.lt.s32.totalorder %v577, %v581
        %vm583 = vcmp.lt.s32.totalorder %v578, %v581
        %v584 = vsel %vm582, %v572, 0.0
        %v585 = vsel %vm583, %v573, 0.0
        %v586 = vld [vmem:[%s327] sm:$0xff]
        %v587 = vadd.f32 %v584, %v585
        %588 = vadd.xlane.f32.xlu0 %v587
        %v589 = vpop.xlane.xlu0 %588
        %v590 = vadd.f32 %v586, %v589
        %vm591 = vcmask 7168
        %592 = vst.msk [vmem:[%s327] sm:$0xff] %vm591, %v590
        // Predicated region
        $region45: #{tpu_custom_call.1} parent=39 // pred_check
          %p593 = pneg %p328
        $region46: #{tpu_custom_call.1} parent=39 // pred_check_branch
          %595 = sbr.rel (%p593) target = $region48
        $region47: #{tpu_custom_call.1} parent=39 // pred_region
          %v596 = vld [vmem:[%s327] sm:$0xff]
          %v597 = vmul.f32 %v596, 0.00390625
          %598 = vst.msk [vmem:[%s327] sm:$0xff] %vm591, %v597
        $region48: #{tpu_custom_call.1} parent=39 // pred_fallthru
          _
        %s599 = sand.u32 %s162, 1
        %s600 = scalar_lea.sflag [#allocation3], %s599
        %s601 = sand.u32 %s162, 1
        %s602 = smul.addr %s601, 16
        %s603 = scalar_lea.vmem [#allocation2], %s602
        %p604 = scmp.lt.s32.totalorder %s25, 1
        %s605 = scalar_select %p604, %s25, 1
        %s606 = smul.addr %s605, 8
        %s607 = scalar_lea.vmem %s6, %s606
        // Predicated region
        $region49: #{tpu_custom_call.1} parent=39 // pred_check
          %p608 = pneg %p172
        $region50: #{tpu_custom_call.1} parent=39 // pred_check_branch
          %610 = sbr.rel (%p608) target = $region52
        $region51: #{tpu_custom_call.1} parent=39 // pred_region
          %s611 = smul.u32 2, %s26
          %s613 = ssub.s32 256, 256
          %614 = vsyncadd %s600, %s613
          %s615 = smul.addr %s25, 2
          %s616 = sadd.s32 %s611, %s615
          %s617 = smul.addr %s616, 128
          %s618 = scalar_lea.hbm %s5, %s617
          %s620 = sshll.u32 %s603, 4
          %s621 = int_to_ptr.vmem [resolvable:$true] %s620
          %623 = dma.vmem_to_hbm [thread:$0]  %s621, 256, %s618, %s600
        $region52: #{tpu_custom_call.1} parent=39 // pred_fallthru
          _
        // Predicated region
        $region53: #{tpu_custom_call.1} parent=39 // pred_check
          %p624 = pneg %p198
        $region54: #{tpu_custom_call.1} parent=39 // pred_check_branch
          %626 = sbr.rel (%p624) target = $region56
        $region55: #{tpu_custom_call.1} parent=39 // pred_region
          _
        $region56: #{tpu_custom_call.1} parent=39 // pred_fallthru
          _
      $region40: #{tpu_custom_call.1} parent=5 // pred_fallthru
        _
      %p627 = scmp.le.s32.totalorder 2, %s16
      // Predicated region
      $region57: #{tpu_custom_call.1} parent=5 // pred_check
        %p628 = pneg %p627
      $region58: #{tpu_custom_call.1} parent=5 // pred_check_branch
        %630 = sbr.rel (%p628) target = $region60
      $region59: #{tpu_custom_call.1} parent=5 // pred_region
        %s631 = ssub.s32 %s16, 2
        // Predicated region
        $region61: #{tpu_custom_call.1} parent=59 // pred_check
          %p632 = pneg %p178
        $region62: #{tpu_custom_call.1} parent=59 // pred_check_branch
          %634 = sbr.rel (%p632) target = $region64
        $region63: #{tpu_custom_call.1} parent=59 // pred_region
          %s635 = sand.u32 %s163, 1
          %s636 = scalar_lea.sflag [#allocation3], %s635
          %s637 = sand.u32 %s163, 1
          %s638 = smul.addr %s637, 16
          %s639 = scalar_lea.vmem [#allocation2], %s638
          %640 = dma.done %s636, 256
        $region64: #{tpu_custom_call.1} parent=59 // pred_fallthru
          _
        // Predicated region
        $region65: #{tpu_custom_call.1} parent=59 // pred_check
          %p641 = pneg %p204
        $region66: #{tpu_custom_call.1} parent=59 // pred_check_branch
          %643 = sbr.rel (%p641) target = $region68
        $region67: #{tpu_custom_call.1} parent=59 // pred_region
          %p644 = scmp.lt.s32.totalorder %s27, 1
          %s645 = scalar_select %p644, %s27, 1
          %s646 = smul.addr %s645, 8
          %s647 = scalar_lea.vmem %s6, %s646
        $region68: #{tpu_custom_call.1} parent=59 // pred_fallthru
          _
      $region60: #{tpu_custom_call.1} parent=5 // pred_fallthru
        _
    $region6: #{tpu_custom_call.1} parent=1 // loop_footer
      %s20 = sadd.s32 1, %s16
    $region7: #{tpu_custom_call.1} parent=1 // loop_footer_branch
      %15 = sbr.rel target = $region3
    $region8: #{tpu_custom_call.1} parent=1 // loop_exit
      _
    %648 = vsyncpa [#allocation3], 1
    %s649 = scalar_lea.sflag [#allocation3], 1
    %650 = vsyncpa %s649, 1

</llo_original>
